<compile_context>
chip_gen: v7x
topology: tpu7x:2x2x1
jax: 0.10.0
libtpu: 0.0.40
codegen_flags: <defaults>
</compile_context>

<pallas_src>
import functools

import jax
import jax.numpy as jnp
from jax import lax
from jax.experimental import pallas as pl
from jax.experimental.pallas import tpu as pltpu


_DN_RT = (((1,), (1,)), ((), ()))   # contract last dims of both:  A @ B^T


def _gw_kernel(x_ref, y_ref, px_ref, py_ref, cost_ref, p_ref,
               *, eps, max_iter, thresh, w_max_iter, w_thresh):
    f32 = jnp.float32
    x = x_ref[...]            # (nx, d)
    y = y_ref[...]            # (ny, d)
    px_row = px_ref[...]      # (1, nx)
    py_row = py_ref[...]      # (1, ny)
    nx = x.shape[0]
    ny = y.shape[0]

    neg_inv_eps = -1.0 / eps
    thresh_sq = thresh * thresh          # squared-norm compare == norm compare
    w_thresh_sq = w_thresh * w_thresh
    tiny = 1e-30                         # f32 underflow guard (ref is f64)

    def eye(n):
        r = lax.broadcasted_iota(jnp.int32, (n, n), 0)
        c = lax.broadcasted_iota(jnp.int32, (n, n), 1)
        return (r == c).astype(f32)

    eye_nx = eye(nx)
    eye_ny = eye(ny)

    def pairwise_sq(pts, eye_n):
        # C[i,j] = ||pi||^2 + ||pj||^2 - 2 <pi,pj>; squared norms are read off
        # the Gram diagonal (masked reduces) so no transpose op is needed.
        gram = lax.dot_general(pts, pts, _DN_RT, preferred_element_type=f32)
        sq_col = jnp.sum(gram * eye_n, axis=1, keepdims=True)   # (n, 1)
        sq_row = jnp.sum(gram * eye_n, axis=0, keepdims=True)   # (1, n)
        return sq_col + sq_row - 2.0 * gram

    Cx = pairwise_sq(x, eye_nx)          # (nx, nx), symmetric
    Cy = pairwise_sq(y, eye_ny)          # (ny, ny), symmetric

    # px as a column: exact row->column conversion via identity matmul.
    px_col = lax.dot_general(eye_nx, px_row, _DN_RT, preferred_element_type=f32)

    # Cxy = (Cx^2 @ px) (+bcast over cols) + (py @ (Cy^2)^T) (+bcast over rows)
    # Cy symmetric  =>  py @ (Cy^2)^T == py @ Cy^2 (plain contraction).
    Cx2 = Cx * Cx
    Cy2 = Cy * Cy
    cxy_col = jnp.dot(Cx2, px_col, preferred_element_type=f32)   # (nx, 1)
    cxy_row = jnp.dot(py_row, Cy2, preferred_element_type=f32)   # (1, ny)
    Cxy2 = 2.0 * (cxy_col + cxy_row)                             # = 2 * Cxy

    def sinkhorn(L):
        K = jnp.exp(L * neg_inv_eps)     # EUP

        def s_cond(carry):
            it, _, _, err_sq = carry
            return jnp.logical_and(it < w_max_iter, err_sq >= w_thresh_sq)

        def s_body(carry):
            it, u, v, _ = carry
            # (K v) as a row vector: rhs-transposed matvec on the MXU.
            Kv = lax.dot_general(v, K, _DN_RT, preferred_element_type=f32)  # (1, nx)
            u_new = px_row * pl.reciprocal(jnp.maximum(Kv, tiny), approx=True)
            # (K^T u) as a row vector: plain matvec on the MXU.
            KTu = jnp.dot(u_new, K, preferred_element_type=f32)            # (1, ny)
            v_new = py_row * pl.reciprocal(jnp.maximum(KTu, tiny), approx=True)
            d = u_new - u
            return it + 1, u_new, v_new, jnp.sum(d * d)

        u0 = jnp.ones((1, nx), f32)
        v0 = jnp.ones((1, ny), f32)
        _, u_row, v_row, _ = lax.while_loop(
            s_cond, s_body, (jnp.int32(0), u0, v0, jnp.float32(jnp.inf)))
        # Exact row->column conversion of u (identity matmul, once per call).
        u_col = lax.dot_general(eye_nx, u_row, _DN_RT, preferred_element_type=f32)
        return u_col * K * v_row         # transport plan (nx, ny)

    def gw_cond(carry):
        it, _, _, err_sq = carry
        return jnp.logical_and(it < max_iter, err_sq >= thresh_sq)

    def gw_body(carry):
        it, P, L, _ = carry
        T1 = jnp.dot(Cx, P, preferred_element_type=f32)    # h1(Cx) @ P
        T2 = jnp.dot(T1, Cy, preferred_element_type=f32)   # @ Cy (== @ Cy^T)
        L_new = Cxy2 - 4.0 * T2          # 2*(Cxy - Cx @ P @ (2*Cy)^T)
        P_new = sinkhorn(L_new)
        d = P_new - P
        return it + 1, P_new, L_new, jnp.sum(d * d)

    P0 = px_col * py_row                 # outer product init
    L0 = jnp.zeros((nx, ny), f32)
    _, P, L, _ = lax.while_loop(
        gw_cond, gw_body, (jnp.int32(0), P0, L0, jnp.float32(jnp.inf)))

    p_ref[...] = P
    pl_sum = jnp.sum(P * L, axis=1, keepdims=True)
    cost_ref[...] = jnp.sum(pl_sum, axis=0, keepdims=True)   # (1, 1)


def entropic_gromov_wasserstein(x, y, px, py, *, eps, max_iter, thresh,
                                w_max_iter, w_thresh):
    """Forward pass of Entropic_GromovWasserstein (square_loss / L2 intra cost)."""
    nx = x.shape[0]
    ny = y.shape[0]
    px_row = px.astype(jnp.float32).reshape(1, nx)
    py_row = py.astype(jnp.float32).reshape(1, ny)

    kernel = functools.partial(
        _gw_kernel, eps=float(eps), max_iter=int(max_iter),
        thresh=float(thresh), w_max_iter=int(w_max_iter),
        w_thresh=float(w_thresh))

    cost, P = pl.pallas_call(
        kernel,
        out_shape=(
            jax.ShapeDtypeStruct((1, 1), jnp.float32),
            jax.ShapeDtypeStruct((nx, ny), jnp.float32),
        ),
        in_specs=[pl.BlockSpec(memory_space=pltpu.MemorySpace.VMEM)
                  for _ in range(4)],
        out_specs=(pl.BlockSpec(memory_space=pltpu.MemorySpace.VMEM),
                   pl.BlockSpec(memory_space=pltpu.MemorySpace.VMEM)),
    )(x.astype(jnp.float32), y.astype(jnp.float32), px_row, py_row)

    return cost[0, 0], P


if __name__ == "__main__":
    key = jax.random.PRNGKey(0)
    kx, ky = jax.random.split(key)

    nx, ny, d = 32, 16, 8
    x = 0.3 * jax.random.normal(kx, (nx, d), dtype=jnp.float32)
    y = 0.3 * jax.random.normal(ky, (ny, d), dtype=jnp.float32)
    px = jnp.ones((nx,), jnp.float32) / nx
    py = jnp.ones((ny,), jnp.float32) / ny

    gw_cost, P = entropic_gromov_wasserstein(
        x, y, px, py,
        eps=1.0, max_iter=20, thresh=1e-9, w_max_iter=50, w_thresh=1e-12)
    (gw_cost, P) = jax.block_until_ready((gw_cost, P))

    assert P.shape == (nx, ny)
    assert bool(jnp.isfinite(gw_cost)) and bool(jnp.all(jnp.isfinite(P)))
    # Sinkhorn column marginal should match py (last scaling applied was v).
    assert bool(jnp.allclose(P.sum(axis=0), py, atol=1e-3))

    print("KERNEL_OK")
</pallas_src>

<mosaic_0001>
module attributes {stable_mosaic.version = 11 : i64} {
  func.func @_gw_kernel(%arg0: memref<32x8xf32, #tpu.memory_space<vmem>>, %arg1: memref<16x8xf32, #tpu.memory_space<vmem>>, %arg2: memref<1x32xf32, #tpu.memory_space<vmem>>, %arg3: memref<1x16xf32, #tpu.memory_space<vmem>>, %arg4: memref<1x1xf32, #tpu.memory_space<vmem>>, %arg5: memref<32x16xf32, #tpu.memory_space<vmem>>) attributes {dimension_semantics = [], scalar_prefetch = 0 : i64, scratch_operands = 0 : i64, tpu.core_type = #tpu.core_type<tc>} {
    %c0 = arith.constant 0 : index
    %c0_0 = arith.constant 0 : index
    %0 = vector.load %arg0[%c0, %c0_0] : memref<32x8xf32, #tpu.memory_space<vmem>>, vector<32x8xf32>
    %c0_1 = arith.constant 0 : index
    %c0_2 = arith.constant 0 : index
    %1 = vector.load %arg1[%c0_1, %c0_2] : memref<16x8xf32, #tpu.memory_space<vmem>>, vector<16x8xf32>
    %c0_3 = arith.constant 0 : index
    %c0_4 = arith.constant 0 : index
    %2 = vector.load %arg2[%c0_3, %c0_4] : memref<1x32xf32, #tpu.memory_space<vmem>>, vector<1x32xf32>
    %c0_5 = arith.constant 0 : index
    %c0_6 = arith.constant 0 : index
    %3 = vector.load %arg3[%c0_5, %c0_6] : memref<1x16xf32, #tpu.memory_space<vmem>>, vector<1x16xf32>
    %4 = tpu.iota {dimensions = array<i32: 0>} : vector<32x32xi32>
    %5 = tpu.iota {dimensions = array<i32: 1>} : vector<32x32xi32>
    %6 = arith.cmpi eq, %4, %5 : vector<32x32xi32>
    %7 = arith.extui %6 : vector<32x32xi1> to vector<32x32xi32>
    %8 = arith.sitofp %7 : vector<32x32xi32> to vector<32x32xf32>
    %9 = tpu.iota {dimensions = array<i32: 0>} : vector<16x16xi32>
    %10 = tpu.iota {dimensions = array<i32: 1>} : vector<16x16xi32>
    %11 = arith.cmpi eq, %9, %10 : vector<16x16xi32>
    %12 = arith.extui %11 : vector<16x16xi1> to vector<16x16xi32>
    %13 = arith.sitofp %12 : vector<16x16xi32> to vector<16x16xf32>
    %cst = arith.constant dense<0.000000e+00> : vector<32x32xf32>
    %14 = tpu.matmul %0, %0, %cst {dimension_numbers = #tpu.dot_dimension_numbers<[1], [1], [0], [0], [0, 0, 1, 0], [], []>} : vector<32x8xf32>, vector<32x8xf32>, vector<32x32xf32> -> vector<32x32xf32>
    %15 = arith.mulf %14, %8 : vector<32x32xf32>
    %cst_7 = arith.constant dense<0.000000e+00> : vector<32xf32>
    %16 = vector.multi_reduction <add>, %15, %cst_7 [1] : vector<32x32xf32> to vector<32xf32>
    %17 = vector.shape_cast %16 : vector<32xf32> to vector<32x1xf32>
    %18 = arith.mulf %14, %8 : vector<32x32xf32>
    %cst_8 = arith.constant dense<0.000000e+00> : vector<32xf32>
    %19 = vector.multi_reduction <add>, %18, %cst_8 [0] : vector<32x32xf32> to vector<32xf32>
    %20 = vector.shape_cast %19 : vector<32xf32> to vector<1x32xf32>
    %21 = vector.broadcast %17 : vector<32x1xf32> to vector<32x32xf32>
    %22 = vector.broadcast %20 : vector<1x32xf32> to vector<32x32xf32>
    %23 = arith.addf %21, %22 : vector<32x32xf32>
    %cst_9 = arith.constant 2.000000e+00 : f32
    %24 = vector.broadcast %cst_9 : f32 to vector<32x32xf32>
    %25 = arith.mulf %24, %14 : vector<32x32xf32>
    %26 = arith.subf %23, %25 : vector<32x32xf32>
    %cst_10 = arith.constant dense<0.000000e+00> : vector<16x16xf32>
    %27 = tpu.matmul %1, %1, %cst_10 {dimension_numbers = #tpu.dot_dimension_numbers<[1], [1], [0], [0], [0, 0, 1, 0], [], []>} : vector<16x8xf32>, vector<16x8xf32>, vector<16x16xf32> -> vector<16x16xf32>
    %28 = arith.mulf %27, %13 : vector<16x16xf32>
    %cst_11 = arith.constant dense<0.000000e+00> : vector<16xf32>
    %29 = vector.multi_reduction <add>, %28, %cst_11 [1] : vector<16x16xf32> to vector<16xf32>
    %30 = vector.shape_cast %29 : vector<16xf32> to vector<16x1xf32>
    %31 = arith.mulf %27, %13 : vector<16x16xf32>
    %cst_12 = arith.constant dense<0.000000e+00> : vector<16xf32>
    %32 = vector.multi_reduction <add>, %31, %cst_12 [0] : vector<16x16xf32> to vector<16xf32>
    %33 = vector.shape_cast %32 : vector<16xf32> to vector<1x16xf32>
    %34 = vector.broadcast %30 : vector<16x1xf32> to vector<16x16xf32>
    %35 = vector.broadcast %33 : vector<1x16xf32> to vector<16x16xf32>
    %36 = arith.addf %34, %35 : vector<16x16xf32>
    %cst_13 = arith.constant 2.000000e+00 : f32
    %37 = vector.broadcast %cst_13 : f32 to vector<16x16xf32>
    %38 = arith.mulf %37, %27 : vector<16x16xf32>
    %39 = arith.subf %36, %38 : vector<16x16xf32>
    %cst_14 = arith.constant dense<0.000000e+00> : vector<32x1xf32>
    %40 = tpu.matmul %8, %2, %cst_14 {dimension_numbers = #tpu.dot_dimension_numbers<[1], [1], [0], [0], [0, 0, 1, 0], [], []>} : vector<32x32xf32>, vector<1x32xf32>, vector<32x1xf32> -> vector<32x1xf32>
    %41 = arith.mulf %26, %26 : vector<32x32xf32>
    %42 = arith.mulf %39, %39 : vector<16x16xf32>
    %cst_15 = arith.constant dense<0.000000e+00> : vector<32x1xf32>
    %43 = tpu.matmul %41, %40, %cst_15 {dimension_numbers = #tpu.dot_dimension_numbers<[1], [0], [0], [1], [0, 0, 1, 1], [], []>} : vector<32x32xf32>, vector<32x1xf32>, vector<32x1xf32> -> vector<32x1xf32>
    %cst_16 = arith.constant dense<0.000000e+00> : vector<1x16xf32>
    %44 = tpu.matmul %3, %42, %cst_16 {dimension_numbers = #tpu.dot_dimension_numbers<[1], [0], [0], [1], [0, 0, 1, 1], [], []>} : vector<1x16xf32>, vector<16x16xf32>, vector<1x16xf32> -> vector<1x16xf32>
    %45 = vector.broadcast %43 : vector<32x1xf32> to vector<32x16xf32>
    %46 = vector.broadcast %44 : vector<1x16xf32> to vector<32x16xf32>
    %47 = arith.addf %45, %46 : vector<32x16xf32>
    %cst_17 = arith.constant 2.000000e+00 : f32
    %48 = vector.broadcast %cst_17 : f32 to vector<32x16xf32>
    %49 = arith.mulf %48, %47 : vector<32x16xf32>
    %50 = vector.broadcast %40 : vector<32x1xf32> to vector<32x16xf32>
    %51 = vector.broadcast %3 : vector<1x16xf32> to vector<32x16xf32>
    %52 = arith.mulf %50, %51 : vector<32x16xf32>
    %cst_18 = arith.constant 0.000000e+00 : f32
    %53 = vector.broadcast %cst_18 : f32 to vector<32x16xf32>
    %c0_i32 = arith.constant 0 : i32
    %cst_19 = arith.constant 0x7F800000 : f32
    %54:4 = scf.while (%arg6 = %c0_i32, %arg7 = %52, %arg8 = %53, %arg9 = %cst_19) : (i32, vector<32x16xf32>, vector<32x16xf32>, f32) -> (i32, vector<32x16xf32>, vector<32x16xf32>, f32) {
      %c20_i32 = arith.constant 20 : i32
      %62 = arith.cmpi slt, %arg6, %c20_i32 : i32
      %cst_26 = arith.constant 1.000000e-18 : f32
      %63 = arith.cmpf oge, %arg9, %cst_26 : f32
      %64 = arith.andi %62, %63 : i1
      scf.condition(%64) %arg6, %arg7, %arg8, %arg9 : i32, vector<32x16xf32>, vector<32x16xf32>, f32
    } do {
    ^bb0(%arg6: i32, %arg7: vector<32x16xf32>, %arg8: vector<32x16xf32>, %arg9: f32):
      %cst_26 = arith.constant dense<0.000000e+00> : vector<32x16xf32>
      %62 = tpu.matmul %26, %arg7, %cst_26 {dimension_numbers = #tpu.dot_dimension_numbers<[1], [0], [0], [1], [0, 0, 1, 1], [], []>} : vector<32x32xf32>, vector<32x16xf32>, vector<32x16xf32> -> vector<32x16xf32>
      %cst_27 = arith.constant dense<0.000000e+00> : vector<32x16xf32>
      %63 = tpu.matmul %62, %39, %cst_27 {dimension_numbers = #tpu.dot_dimension_numbers<[1], [0], [0], [1], [0, 0, 1, 1], [], []>} : vector<32x16xf32>, vector<16x16xf32>, vector<32x16xf32> -> vector<32x16xf32>
      %cst_28 = arith.constant 4.000000e+00 : f32
      %64 = vector.broadcast %cst_28 : f32 to vector<32x16xf32>
      %65 = arith.mulf %64, %63 : vector<32x16xf32>
      %66 = arith.subf %49, %65 : vector<32x16xf32>
      %cst_29 = arith.constant -1.000000e+00 : f32
      %67 = vector.broadcast %cst_29 : f32 to vector<32x16xf32>
      %68 = arith.mulf %66, %67 : vector<32x16xf32>
      %69 = math.exp %68 : vector<32x16xf32>
      %cst_30 = arith.constant 1.000000e+00 : f32
      %70 = vector.broadcast %cst_30 : f32 to vector<1x32xf32>
      %cst_31 = arith.constant 1.000000e+00 : f32
      %71 = vector.broadcast %cst_31 : f32 to vector<1x16xf32>
      %c0_i32_32 = arith.constant 0 : i32
      %cst_33 = arith.constant 0x7F800000 : f32
      %72:4 = scf.while (%arg10 = %c0_i32_32, %arg11 = %70, %arg12 = %71, %arg13 = %cst_33) : (i32, vector<1x32xf32>, vector<1x16xf32>, f32) -> (i32, vector<1x32xf32>, vector<1x16xf32>, f32) {
        %c50_i32 = arith.constant 50 : i32
        %85 = arith.cmpi slt, %arg10, %c50_i32 : i32
        %cst_36 = arith.constant 1.000000e-24 : f32
        %86 = arith.cmpf oge, %arg13, %cst_36 : f32
        %87 = arith.andi %85, %86 : i1
        scf.condition(%87) %arg10, %arg11, %arg12, %arg13 : i32, vector<1x32xf32>, vector<1x16xf32>, f32
      } do {
      ^bb0(%arg10: i32, %arg11: vector<1x32xf32>, %arg12: vector<1x16xf32>, %arg13: f32):
        %cst_36 = arith.constant dense<0.000000e+00> : vector<1x32xf32>
        %85 = tpu.matmul %arg12, %69, %cst_36 {dimension_numbers = #tpu.dot_dimension_numbers<[1], [1], [0], [0], [0, 0, 1, 0], [], []>} : vector<1x16xf32>, vector<32x16xf32>, vector<1x32xf32> -> vector<1x32xf32>
        %cst_37 = arith.constant 1.000000e-30 : f32
        %86 = vector.broadcast %cst_37 : f32 to vector<1x32xf32>
        %87 = arith.maximumf %85, %86 : vector<1x32xf32>
        %88 = tpu.reciprocal %87 {approx = true} : vector<1x32xf32> -> vector<1x32xf32>
        %89 = arith.mulf %2, %88 : vector<1x32xf32>
        %cst_38 = arith.constant dense<0.000000e+00> : vector<1x16xf32>
        %90 = tpu.matmul %89, %69, %cst_38 {dimension_numbers = #tpu.dot_dimension_numbers<[1], [0], [0], [1], [0, 0, 1, 1], [], []>} : vector<1x32xf32>, vector<32x16xf32>, vector<1x16xf32> -> vector<1x16xf32>
        %cst_39 = arith.constant 1.000000e-30 : f32
        %91 = vector.broadcast %cst_39 : f32 to vector<1x16xf32>
        %92 = arith.maximumf %90, %91 : vector<1x16xf32>
        %93 = tpu.reciprocal %92 {approx = true} : vector<1x16xf32> -> vector<1x16xf32>
        %94 = arith.mulf %3, %93 : vector<1x16xf32>
        %95 = arith.subf %89, %arg11 : vector<1x32xf32>
        %c1_i32_40 = arith.constant 1 : i32
        %96 = arith.addi %arg10, %c1_i32_40 : i32
        %97 = arith.mulf %95, %95 : vector<1x32xf32>
        %98 = vector.shape_cast %97 : vector<1x32xf32> to vector<1x1x32xf32>
        %cst_41 = arith.constant dense<0.000000e+00> : vector<1xf32>
        %99 = vector.multi_reduction <add>, %98, %cst_41 [1, 2] : vector<1x1x32xf32> to vector<1xf32>
        %100 = vector.shape_cast %99 : vector<1xf32> to vector<1x1x1xf32>
        %101 = vector.extract %100[0, 0, 0] : f32 from vector<1x1x1xf32>
        scf.yield %96, %89, %94, %101 : i32, vector<1x32xf32>, vector<1x16xf32>, f32
      }
      %cst_34 = arith.constant dense<0.000000e+00> : vector<32x1xf32>
      %73 = tpu.matmul %8, %72#1, %cst_34 {dimension_numbers = #tpu.dot_dimension_numbers<[1], [1], [0], [0], [0, 0, 1, 0], [], []>} : vector<32x32xf32>, vector<1x32xf32>, vector<32x1xf32> -> vector<32x1xf32>
      %74 = vector.broadcast %73 : vector<32x1xf32> to vector<32x16xf32>
      %75 = arith.mulf %74, %69 : vector<32x16xf32>
      %76 = vector.broadcast %72#2 : vector<1x16xf32> to vector<32x16xf32>
      %77 = arith.mulf %75, %76 : vector<32x16xf32>
      %78 = arith.subf %77, %arg7 : vector<32x16xf32>
      %c1_i32 = arith.constant 1 : i32
      %79 = arith.addi %arg6, %c1_i32 : i32
      %80 = arith.mulf %78, %78 : vector<32x16xf32>
      %81 = vector.shape_cast %80 : vector<32x16xf32> to vector<1x32x16xf32>
      %cst_35 = arith.constant dense<0.000000e+00> : vector<1xf32>
      %82 = vector.multi_reduction <add>, %81, %cst_35 [1, 2] : vector<1x32x16xf32> to vector<1xf32>
      %83 = vector.shape_cast %82 : vector<1xf32> to vector<1x1x1xf32>
      %84 = vector.extract %83[0, 0, 0] : f32 from vector<1x1x1xf32>
      scf.yield %79, %77, %66, %84 : i32, vector<32x16xf32>, vector<32x16xf32>, f32
    }
    %c0_20 = arith.constant 0 : index
    %c0_21 = arith.constant 0 : index
    %55 = vector.load %arg5[%c0_20, %c0_21] : memref<32x16xf32, #tpu.memory_space<vmem>>, vector<32x16xf32>
    tpu.vector_store %arg5[%c0_20, %c0_21], %54#1 {strides = array<i32>} : memref<32x16xf32, #tpu.memory_space<vmem>>, vector<32x16xf32>,
    %56 = arith.mulf %54#1, %54#2 : vector<32x16xf32>
    %cst_22 = arith.constant dense<0.000000e+00> : vector<32xf32>
    %57 = vector.multi_reduction <add>, %56, %cst_22 [1] : vector<32x16xf32> to vector<32xf32>
    %58 = vector.shape_cast %57 : vector<32xf32> to vector<32x1xf32>
    %cst_23 = arith.constant dense<0.000000e+00> : vector<1xf32>
    %59 = vector.multi_reduction <add>, %58, %cst_23 [0] : vector<32x1xf32> to vector<1xf32>
    %60 = vector.shape_cast %59 : vector<1xf32> to vector<1x1xf32>
    %c0_24 = arith.constant 0 : index
    %c0_25 = arith.constant 0 : index
    %61 = vector.load %arg4[%c0_24, %c0_25] : memref<1x1xf32, #tpu.memory_space<vmem>>, vector<1x1xf32>
    tpu.vector_store %arg4[%c0_24, %c0_25], %60 {strides = array<i32>} : memref<1x1xf32, #tpu.memory_space<vmem>>, vector<1x1xf32>,
    return
  }
}

</mosaic_0001>

<llo_original>
// kernel: tpu_custom_call.1
$region0: #{tpu_custom_call.1}
  #allocation0 [shape = 'u32[]', space=smem, size = 0x4, offset = 0x4, fixed_abs, tag = 'smem constant byte address 0x4 - core index']
  #allocation1 [shape = 'u32[144,128]{1,0:T(1,128)}', space=vmem, size = 0x12000, scoped, tag = 'internal scratch']
  %s0 = inlined_call_operand.vmem [shape: f32[32,8], index: 0, kind: input, shape index: {}]
  %s1 = inlined_call_operand.vmem [shape: f32[16,8], index: 1, kind: input, shape index: {}]
  %s2 = inlined_call_operand.vmem [shape: f32[1,32], index: 2, kind: input, shape index: {}]
  %s3 = inlined_call_operand.vmem [shape: f32[1,16], index: 3, kind: input, shape index: {}]
  %s4 = inlined_call_operand.hbm [shape: f32[1,1], index: 4, kind: output, shape index: {0}]
  %s5 = inlined_call_operand.vmem [shape: f32[32,16], index: 5, kind: output, shape index: {1}]
  %6 = xla_tuple %s4, %s5
  %s7 = sld [smem:[#allocation0]]
  $region48: #{tpu_custom_call.1} parent=0
    _
  %s9 = ssub.s32 1, %s7
  %s10 = scalar_select 0, %s9, %s7
  $region1: #{tpu_custom_call.1} parent=0
    #allocation2 [shape = 'u8[512]{0}', space=vmem, size = 0x400, scoped, tag = 'output window, operand 0, single buffered']
    #allocation3 [shape = 's32[1]{0}', space=sflag, size = 0x4, scoped, tag = 'scoped memory for tpu_custom_call.1']
    %11 = vsyncpa [#allocation3], 0
    // Predicated region
    $region2: #{tpu_custom_call.1} parent=1 // pred_check
      _
    $region3: #{tpu_custom_call.1} parent=1 // pred_check_branch
      %13 = sbr.rel (0) target = $region5
    $region4: #{tpu_custom_call.1} parent=1 // pred_region
      _
    $region5: #{tpu_custom_call.1} parent=1 // pred_fallthru
      _
    // Predicated region
    $region6: #{tpu_custom_call.1} parent=1 // pred_check
      _
    $region7: #{tpu_custom_call.1} parent=1 // pred_check_branch
      %15 = sbr.rel (0) target = $region9
    $region8: #{tpu_custom_call.1} parent=1 // pred_region
      _
    $region9: #{tpu_custom_call.1} parent=1 // pred_fallthru
      _
    // Predicated region
    $region10: #{tpu_custom_call.1} parent=1 // pred_check
      _
    $region11: #{tpu_custom_call.1} parent=1 // pred_check_branch
      %17 = sbr.rel (0) target = $region13
    $region12: #{tpu_custom_call.1} parent=1 // pred_region
      _
    $region13: #{tpu_custom_call.1} parent=1 // pred_fallthru
      _
    // Predicated region
    $region14: #{tpu_custom_call.1} parent=1 // pred_check
      _
    $region15: #{tpu_custom_call.1} parent=1 // pred_check_branch
      %19 = sbr.rel (0) target = $region17
    $region16: #{tpu_custom_call.1} parent=1 // pred_region
      _
    $region17: #{tpu_custom_call.1} parent=1 // pred_fallthru
      _
    %v20 = vld [vmem:[%s0] sm:$0xff]
    %v21 = vld [vmem:[%s0 + $0x8] sm:$0xff]
    %v22 = vld [vmem:[%s0 + $0x10] sm:$0xff]
    %v23 = vld [vmem:[%s0 + $0x18] sm:$0xff]
    %v24 = vld [vmem:[%s1] sm:$0xff]
    %v25 = vld [vmem:[%s1 + $0x8] sm:$0xff]
    %v26 = vld [vmem:[%s2] sm:$0x1]
    %v27 = vld [vmem:[%s3] sm:$0x1]
    %v28 = vlaneseq
    %v29 = vshrl.u32 %v28, 7
    %v30 = vadd.s32 %v29, 8
    %v31 = vadd.s32 %v29, 16
    %v32 = vadd.s32 %v29, 24
    %v33 = vlaneseq
    %v34 = vand.u32 %v33, 127
    %vm35 = vcmp.eq.s32.totalorder %v29, %v34
    %vm36 = vcmp.eq.s32.totalorder %v30, %v34
    %vm37 = vcmp.eq.s32.totalorder %v31, %v34
    %vm38 = vcmp.eq.s32.totalorder %v32, %v34
    %v39 = vsel %vm35, 1, 0
    %v40 = vsel %vm36, 1, 0
    %v41 = vsel %vm37, 1, 0
    %v42 = vsel %vm38, 1, 0
    %v43 = vcvt.s32.f32 %v39
    %v44 = vcvt.s32.f32 %v40
    %v45 = vcvt.s32.f32 %v41
    %v46 = vcvt.s32.f32 %v42
    %vm47 = vcmask 64512
    %v49 = vsel %vm47, %v20, 0
    %v52 = vsel %vm47, %v21, 0
    %v55 = vsel %vm47, %v22, 0
    %v58 = vsel %vm47, %v23, 0
    %60 = vmatprep.subr.mxu0 0.0
    %61 = vmatpush1.xpose.msra.mxu0 %v49
    %62 = vmatprep.subr.mxu0 0.0
    %63 = vmatpush1.xpose.msra.mxu0 %v52
    %64 = vmatprep.subr.mxu0 0.0
    %65 = vmatpush1.xpose.msra.mxu0 %v55
    %66 = vmatprep.subr.mxu0 0.0
    %67 = vmatpush1.xpose.msra.mxu0 %v58
    %68 = vmatprep.subr.mxu0 0.0
    %69 = vmatpush1.xpose.msra.mxu0 0.0
    %70 = vmatprep.subr.mxu0 0.0
    %71 = vmatpush1.xpose.msra.mxu0 0.0
    %72 = vmatprep.subr.mxu0 0.0
    %73 = vmatpush1.xpose.msra.mxu0 0.0
    %74 = vmatprep.subr.mxu0 0.0
    %75 = vmatpush1.xpose.msra.mxu0 0.0
    %76 = vmatprep.subr.mxu0 0.0
    %77 = vmatpush1.xpose.msra.mxu0 0.0
    %78 = vmatprep.subr.mxu0 0.0
    %79 = vmatpush1.xpose.msra.mxu0 0.0
    %80 = vmatprep.subr.mxu0 0.0
    %81 = vmatpush1.xpose.msra.mxu0 0.0
    %82 = vmatprep.subr.mxu0 0.0
    %83 = vmatpush1.xpose.msra.mxu0 0.0
    %84 = vmatprep.subr.mxu0 0.0
    %85 = vmatpush1.xpose.msra.mxu0 0.0
    %86 = vmatprep.subr.mxu0 0.0
    %87 = vmatpush1.xpose.msra.mxu0 0.0
    %88 = vmatprep.subr.mxu0 0.0
    %89 = vmatpush1.xpose.msra.mxu0 0.0
    %90 = vmatprep.subr.mxu0 0.0
    %91 = vmatpush1.xpose.msra.mxu0 0.0
    %92 = vmatprep.subr.mxu0 0.0
    %93 = vmatpush1.xpose.msra.mxu0 0.0
    %94 = vmatprep.subr.mxu0 0.0
    %95 = vmatpush1.xpose.msra.mxu0 0.0
    %96 = vmatprep.subr.mxu0 0.0
    %97 = vmatpush1.xpose.msra.mxu0 0.0
    %98 = vmatprep.subr.mxu0 0.0
    %99 = vmatpush1.xpose.msra.mxu0 0.0
    %100 = vmatprep.subr.mxu0 0.0
    %101 = vmatpush1.xpose.msra.mxu0 0.0
    %102 = vmatprep.subr.mxu0 0.0
    %103 = vmatpush1.xpose.msra.mxu0 0.0
    %104 = vmatprep.subr.mxu0 0.0
    %105 = vmatpush1.xpose.msra.mxu0 0.0
    %106 = vmatprep.subr.mxu0 0.0
    %107 = vmatpush1.xpose.msra.mxu0 0.0
    %108 = vmatprep.subr.mxu0 0.0
    %109 = vmatpush1.xpose.msra.mxu0 0.0
    %110 = vmatprep.subr.mxu0 0.0
    %111 = vmatpush1.xpose.msra.mxu0 0.0
    %112 = vmatprep.subr.mxu0 0.0
    %113 = vmatpush1.xpose.msra.mxu0 0.0
    %114 = vmatprep.subr.mxu0 0.0
    %115 = vmatpush1.xpose.msra.mxu0 0.0
    %116 = vmatprep.subr.mxu0 0.0
    %117 = vmatpush1.xpose.msra.mxu0 0.0
    %118 = vmatprep.subr.mxu0 0.0
    %119 = vmatpush1.xpose.msra.mxu0 0.0
    %120 = vmatprep.subr.mxu0 0.0
    %121 = vmatpush1.xpose.msra.mxu0 0.0
    %122 = vmatprep.subr.mxu0 0.0
    %123 = vmatpush1.xpose.msra.mxu0 0.0
    %124 = vmatprep.mubr.f32.mxu0 0.0
    %125 = vmatmul.mubr.f32.gmra.mrb[0].mxu0 %v49
    %v126 = vpop.f32.mrb[0].mxu0
    %v127 = vadd.f32 0.0, %v126
    %v128 = vpop.f32.mrb[0].mxu0
    %129 = vmatprep.mubr.f32.mxu0 0.0
    %130 = vmatmul.mubr.f32.gmra.mrb[0].mxu0 %v52
    %v131 = vpop.f32.mrb[0].mxu0
    %v132 = vadd.f32 0.0, %v131
    %v133 = vpop.f32.mrb[0].mxu0
    %134 = vmatprep.mubr.f32.mxu0 0.0
    %135 = vmatmul.mubr.f32.gmra.mrb[0].mxu0 %v55
    %v136 = vpop.f32.mrb[0].mxu0
    %v137 = vadd.f32 0.0, %v136
    %v138 = vpop.f32.mrb[0].mxu0
    %139 = vmatprep.mubr.f32.mxu0 0.0
    %140 = vmatmul.mubr.f32.gmra.mrb[0].mxu0 %v58
    %v141 = vpop.f32.mrb[0].mxu0
    %v142 = vadd.f32 0.0, %v141
    %v143 = vpop.f32.mrb[0].mxu0
    %144 = vdwg.mxu0
    %v145 = vmul.f32 %v127, %v43
    %v146 = vmul.f32 %v132, %v44
    %v147 = vmul.f32 %v137, %v45
    %v148 = vmul.f32 %v142, %v46
    %vm149 = vcmask 261120
    %v150 = vsel %vm149, %v145, 0.0
    %151 = vadd.xlane.f32.xlu0 %v150
    %v152 = vpop.xlane.xlu0 %151
    %v153 = vsel %vm149, %v146, 0.0
    %154 = vadd.xlane.f32.xlu0 %v153
    %v155 = vpop.xlane.xlu0 %154
    %v156 = vsel %vm149, %v147, 0.0
    %157 = vadd.xlane.f32.xlu0 %v156
    %v158 = vpop.xlane.xlu0 %157
    %v159 = vsel %vm149, %v148, 0.0
    %160 = vadd.xlane.f32.xlu0 %v159
    %v161 = vpop.xlane.xlu0 %160
    %v162 = vadd.f32 %v150, %v153
    %v163 = vadd.f32 %v162, %v156
    %v164 = vadd.f32 %v163, %v159
    %v165 = vrot.slane %v164, 4
    %v166 = vadd.f32 %v164, %v165
    %v167 = vrot.slane %v166, 2
    %v168 = vadd.f32 %v166, %v167
    %v169 = vrot.slane %v168, 1
    %v170 = vadd.f32 %v168, %v169
    %v171 = vadd.f32 %v152, %v170
    %v172 = vadd.f32 %v155, %v170
    %v173 = vadd.f32 %v158, %v170
    %v174 = vadd.f32 %v161, %v170
    %v175 = vmul.f32 %v127, 2.0
    %v176 = vmul.f32 %v132, 2.0
    %v177 = vmul.f32 %v137, 2.0
    %v178 = vmul.f32 %v142, 2.0
    %v179 = vsub.f32 %v171, %v175
    %v180 = vsub.f32 %v172, %v176
    %v181 = vsub.f32 %v173, %v177
    %v182 = vsub.f32 %v174, %v178
    %v184 = vsel %vm47, %v24, 0
    %v187 = vsel %vm47, %v25, 0
    %189 = vmatprep.subr.mxu0 0.0
    %190 = vmatpush1.xpose.msra.mxu0 %v184
    %191 = vmatprep.subr.mxu0 0.0
    %192 = vmatpush1.xpose.msra.mxu0 %v187
    %193 = vmatprep.subr.mxu0 0.0
    %194 = vmatpush1.xpose.msra.mxu0 0.0
    %195 = vmatprep.subr.mxu0 0.0
    %196 = vmatpush1.xpose.msra.mxu0 0.0
    %197 = vmatprep.subr.mxu0 0.0
    %198 = vmatpush1.xpose.msra.mxu0 0.0
    %199 = vmatprep.subr.mxu0 0.0
    %200 = vmatpush1.xpose.msra.mxu0 0.0
    %201 = vmatprep.subr.mxu0 0.0
    %202 = vmatpush1.xpose.msra.mxu0 0.0
    %203 = vmatprep.subr.mxu0 0.0
    %204 = vmatpush1.xpose.msra.mxu0 0.0
    %205 = vmatprep.subr.mxu0 0.0
    %206 = vmatpush1.xpose.msra.mxu0 0.0
    %207 = vmatprep.subr.mxu0 0.0
    %208 = vmatpush1.xpose.msra.mxu0 0.0
    %209 = vmatprep.subr.mxu0 0.0
    %210 = vmatpush1.xpose.msra.mxu0 0.0
    %211 = vmatprep.subr.mxu0 0.0
    %212 = vmatpush1.xpose.msra.mxu0 0.0
    %213 = vmatprep.subr.mxu0 0.0
    %214 = vmatpush1.xpose.msra.mxu0 0.0
    %215 = vmatprep.subr.mxu0 0.0
    %216 = vmatpush1.xpose.msra.mxu0 0.0
    %217 = vmatprep.subr.mxu0 0.0
    %218 = vmatpush1.xpose.msra.mxu0 0.0
    %219 = vmatprep.subr.mxu0 0.0
    %220 = vmatpush1.xpose.msra.mxu0 0.0
    %221 = vmatprep.subr.mxu0 0.0
    %222 = vmatpush1.xpose.msra.mxu0 0.0
    %223 = vmatprep.subr.mxu0 0.0
    %224 = vmatpush1.xpose.msra.mxu0 0.0
    %225 = vmatprep.subr.mxu0 0.0
    %226 = vmatpush1.xpose.msra.mxu0 0.0
    %227 = vmatprep.subr.mxu0 0.0
    %228 = vmatpush1.xpose.msra.mxu0 0.0
    %229 = vmatprep.subr.mxu0 0.0
    %230 = vmatpush1.xpose.msra.mxu0 0.0
    %231 = vmatprep.subr.mxu0 0.0
    %232 = vmatpush1.xpose.msra.mxu0 0.0
    %233 = vmatprep.subr.mxu0 0.0
    %234 = vmatpush1.xpose.msra.mxu0 0.0
    %235 = vmatprep.subr.mxu0 0.0
    %236 = vmatpush1.xpose.msra.mxu0 0.0
    %237 = vmatprep.subr.mxu0 0.0
    %238 = vmatpush1.xpose.msra.mxu0 0.0
    %239 = vmatprep.subr.mxu0 0.0
    %240 = vmatpush1.xpose.msra.mxu0 0.0
    %241 = vmatprep.subr.mxu0 0.0
    %242 = vmatpush1.xpose.msra.mxu0 0.0
    %243 = vmatprep.subr.mxu0 0.0
    %244 = vmatpush1.xpose.msra.mxu0 0.0
    %245 = vmatprep.subr.mxu0 0.0
    %246 = vmatpush1.xpose.msra.mxu0 0.0
    %247 = vmatprep.subr.mxu0 0.0
    %248 = vmatpush1.xpose.msra.mxu0 0.0
    %249 = vmatprep.subr.mxu0 0.0
    %250 = vmatpush1.xpose.msra.mxu0 0.0
    %251 = vmatprep.subr.mxu0 0.0
    %252 = vmatpush1.xpose.msra.mxu0 0.0
    %253 = vmatprep.mubr.f32.mxu0 0.0
    %254 = vmatmul.mubr.f32.gmra.mrb[0].mxu0 %v184
    %v255 = vpop.f32.mrb[0].mxu0
    %v256 = vadd.f32 0.0, %v255
    %v257 = vpop.f32.mrb[0].mxu0
    %258 = vmatprep.mubr.f32.mxu0 0.0
    %259 = vmatmul.mubr.f32.gmra.mrb[0].mxu0 %v187
    %v260 = vpop.f32.mrb[0].mxu0
    %v261 = vadd.f32 0.0, %v260
    %v262 = vpop.f32.mrb[0].mxu0
    %263 = vdwg.mxu0
    %v264 = vmul.f32 %v256, %v43
    %v265 = vmul.f32 %v261, %v44
    %vm266 = vcmask 130048
    %v267 = vsel %vm266, %v264, 0.0
    %268 = vadd.xlane.f32.xlu0 %v267
    %v269 = vpop.xlane.xlu0 %268
    %v270 = vsel %vm266, %v265, 0.0
    %271 = vadd.xlane.f32.xlu0 %v270
    %v272 = vpop.xlane.xlu0 %271
    %v273 = vadd.f32 %v267, %v270
    %v274 = vrot.slane %v273, 4
    %v275 = vadd.f32 %v273, %v274
    %v276 = vrot.slane %v275, 2
    %v277 = vadd.f32 %v275, %v276
    %v278 = vrot.slane %v277, 1
    %v279 = vadd.f32 %v277, %v278
    %v280 = vadd.f32 %v269, %v279
    %v281 = vadd.f32 %v272, %v279
    %v282 = vmul.f32 %v256, 2.0
    %v283 = vmul.f32 %v261, 2.0
    %v284 = vsub.f32 %v280, %v282
    %v285 = vsub.f32 %v281, %v283
    %v287 = vlaneseq
    %v288 = vshrl.u32 %v287, 7
    %v289 = vsub.s32 0, %v288
    %v290 = vrot.slane %v26, %v289
    %v292 = vmul.f32 %v43, %v290
    %v293 = vmul.f32 %v44, %v290
    %v294 = vmul.f32 %v45, %v290
    %v295 = vmul.f32 %v46, %v290
    %v296 = vsel %vm149, %v292, 0.0
    %297 = vadd.xlane.f32.xlu0 %v296
    %v298 = vpop.xlane.xlu0 %297
    %v299 = vsel %vm149, %v293, 0.0
    %300 = vadd.xlane.f32.xlu0 %v299
    %v301 = vpop.xlane.xlu0 %300
    %v302 = vsel %vm149, %v294, 0.0
    %303 = vadd.xlane.f32.xlu0 %v302
    %v304 = vpop.xlane.xlu0 %303
    %v305 = vsel %vm149, %v295, 0.0
    %306 = vadd.xlane.f32.xlu0 %v305
    %v307 = vpop.xlane.xlu0 %306
    %v308 = vmul.f32 %v179, %v179
    %v309 = vmul.f32 %v180, %v180
    %v310 = vmul.f32 %v181, %v181
    %v311 = vmul.f32 %v182, %v182
    %v312 = vmul.f32 %v284, %v284
    %v313 = vmul.f32 %v285, %v285
    %v315 = vsel %vm149, %v308, 0
    %v318 = vsel %vm149, %v309, 0
    %v321 = vsel %vm149, %v310, 0
    %v324 = vsel %vm149, %v311, 0
    %326 = vmatprep.subr.mxu0 0.0
    %327 = vmatpush1.msra.mxu0 %v298
    %328 = vmatprep.subr.mxu0 0.0
    %329 = vmatpush1.msra.mxu0 %v301
    %330 = vmatprep.subr.mxu0 0.0
    %331 = vmatpush1.msra.mxu0 %v304
    %332 = vmatprep.subr.mxu0 0.0
    %333 = vmatpush1.msra.mxu0 %v307
    %334 = vmatprep.subr.mxu0 0.0
    %335 = vmatpush1.msra.mxu0 0.0
    %336 = vmatprep.subr.mxu0 0.0
    %337 = vmatpush1.msra.mxu0 0.0
    %338 = vmatprep.subr.mxu0 0.0
    %339 = vmatpush1.msra.mxu0 0.0
    %340 = vmatprep.subr.mxu0 0.0
    %341 = vmatpush1.msra.mxu0 0.0
    %342 = vmatprep.subr.mxu0 0.0
    %343 = vmatpush1.msra.mxu0 0.0
    %344 = vmatprep.subr.mxu0 0.0
    %345 = vmatpush1.msra.mxu0 0.0
    %346 = vmatprep.subr.mxu0 0.0
    %347 = vmatpush1.msra.mxu0 0.0
    %348 = vmatprep.subr.mxu0 0.0
    %349 = vmatpush1.msra.mxu0 0.0
    %350 = vmatprep.subr.mxu0 0.0
    %351 = vmatpush1.msra.mxu0 0.0
    %352 = vmatprep.subr.mxu0 0.0
    %353 = vmatpush1.msra.mxu0 0.0
    %354 = vmatprep.subr.mxu0 0.0
    %355 = vmatpush1.msra.mxu0 0.0
    %356 = vmatprep.subr.mxu0 0.0
    %357 = vmatpush1.msra.mxu0 0.0
    %358 = vmatprep.subr.mxu0 0.0
    %359 = vmatpush1.msra.mxu0 0.0
    %360 = vmatprep.subr.mxu0 0.0
    %361 = vmatpush1.msra.mxu0 0.0
    %362 = vmatprep.subr.mxu0 0.0
    %363 = vmatpush1.msra.mxu0 0.0
    %364 = vmatprep.subr.mxu0 0.0
    %365 = vmatpush1.msra.mxu0 0.0
    %366 = vmatprep.subr.mxu0 0.0
    %367 = vmatpush1.msra.mxu0 0.0
    %368 = vmatprep.subr.mxu0 0.0
    %369 = vmatpush1.msra.mxu0 0.0
    %370 = vmatprep.subr.mxu0 0.0
    %371 = vmatpush1.msra.mxu0 0.0
    %372 = vmatprep.subr.mxu0 0.0
    %373 = vmatpush1.msra.mxu0 0.0
    %374 = vmatprep.subr.mxu0 0.0
    %375 = vmatpush1.msra.mxu0 0.0
    %376 = vmatprep.subr.mxu0 0.0
    %377 = vmatpush1.msra.mxu0 0.0
    %378 = vmatprep.subr.mxu0 0.0
    %379 = vmatpush1.msra.mxu0 0.0
    %380 = vmatprep.subr.mxu0 0.0
    %381 = vmatpush1.msra.mxu0 0.0
    %382 = vmatprep.subr.mxu0 0.0
    %383 = vmatpush1.msra.mxu0 0.0
    %384 = vmatprep.subr.mxu0 0.0
    %385 = vmatpush1.msra.mxu0 0.0
    %386 = vmatprep.subr.mxu0 0.0
    %387 = vmatpush1.msra.mxu0 0.0
    %388 = vmatprep.subr.mxu0 0.0
    %389 = vmatpush1.msra.mxu0 0.0
    %390 = vmatprep.mubr.f32.mxu0 0.0
    %391 = vmatmul.mubr.f32.gmra.mrb[0].mxu0 %v315
    %v392 = vpop.f32.mrb[0].mxu0
    %v393 = vadd.f32 0.0, %v392
    %v394 = vpop.f32.mrb[0].mxu0
    %395 = vmatprep.mubr.f32.mxu0 0.0
    %396 = vmatmul.mubr.f32.gmra.mrb[0].mxu0 %v318
    %v397 = vpop.f32.mrb[0].mxu0
    %v398 = vadd.f32 0.0, %v397
    %v399 = vpop.f32.mrb[0].mxu0
    %400 = vmatprep.mubr.f32.mxu0 0.0
    %401 = vmatmul.mubr.f32.gmra.mrb[0].mxu0 %v321
    %v402 = vpop.f32.mrb[0].mxu0
    %v403 = vadd.f32 0.0, %v402
    %v404 = vpop.f32.mrb[0].mxu0
    %405 = vmatprep.mubr.f32.mxu0 0.0
    %406 = vmatmul.mubr.f32.gmra.mrb[0].mxu0 %v324
    %v407 = vpop.f32.mrb[0].mxu0
    %v408 = vadd.f32 0.0, %v407
    %v409 = vpop.f32.mrb[0].mxu0
    %410 = vdwg.mxu0
    %v412 = vsel %vm266, %v27, 0
    %414 = vmatprep.subr.mxu0 0.0
    %415 = vmatpush1.msra.mxu0 %v312
    %416 = vmatprep.subr.mxu0 0.0
    %417 = vmatpush1.msra.mxu0 %v313
    %418 = vmatprep.subr.mxu0 0.0
    %419 = vmatpush1.msra.mxu0 0.0
    %420 = vmatprep.subr.mxu0 0.0
    %421 = vmatpush1.msra.mxu0 0.0
    %422 = vmatprep.subr.mxu0 0.0
    %423 = vmatpush1.msra.mxu0 0.0
    %424 = vmatprep.subr.mxu0 0.0
    %425 = vmatpush1.msra.mxu0 0.0
    %426 = vmatprep.subr.mxu0 0.0
    %427 = vmatpush1.msra.mxu0 0.0
    %428 = vmatprep.subr.mxu0 0.0
    %429 = vmatpush1.msra.mxu0 0.0
    %430 = vmatprep.subr.mxu0 0.0
    %431 = vmatpush1.msra.mxu0 0.0
    %432 = vmatprep.subr.mxu0 0.0
    %433 = vmatpush1.msra.mxu0 0.0
    %434 = vmatprep.subr.mxu0 0.0
    %435 = vmatpush1.msra.mxu0 0.0
    %436 = vmatprep.subr.mxu0 0.0
    %437 = vmatpush1.msra.mxu0 0.0
    %438 = vmatprep.subr.mxu0 0.0
    %439 = vmatpush1.msra.mxu0 0.0
    %440 = vmatprep.subr.mxu0 0.0
    %441 = vmatpush1.msra.mxu0 0.0
    %442 = vmatprep.subr.mxu0 0.0
    %443 = vmatpush1.msra.mxu0 0.0
    %444 = vmatprep.subr.mxu0 0.0
    %445 = vmatpush1.msra.mxu0 0.0
    %446 = vmatprep.subr.mxu0 0.0
    %447 = vmatpush1.msra.mxu0 0.0
    %448 = vmatprep.subr.mxu0 0.0
    %449 = vmatpush1.msra.mxu0 0.0
    %450 = vmatprep.subr.mxu0 0.0
    %451 = vmatpush1.msra.mxu0 0.0
    %452 = vmatprep.subr.mxu0 0.0
    %453 = vmatpush1.msra.mxu0 0.0
    %454 = vmatprep.subr.mxu0 0.0
    %455 = vmatpush1.msra.mxu0 0.0
    %456 = vmatprep.subr.mxu0 0.0
    %457 = vmatpush1.msra.mxu0 0.0
    %458 = vmatprep.subr.mxu0 0.0
    %459 = vmatpush1.msra.mxu0 0.0
    %460 = vmatprep.subr.mxu0 0.0
    %461 = vmatpush1.msra.mxu0 0.0
    %462 = vmatprep.subr.mxu0 0.0
    %463 = vmatpush1.msra.mxu0 0.0
    %464 = vmatprep.subr.mxu0 0.0
    %465 = vmatpush1.msra.mxu0 0.0
    %466 = vmatprep.subr.mxu0 0.0
    %467 = vmatpush1.msra.mxu0 0.0
    %468 = vmatprep.subr.mxu0 0.0
    %469 = vmatpush1.msra.mxu0 0.0
    %470 = vmatprep.subr.mxu0 0.0
    %471 = vmatpush1.msra.mxu0 0.0
    %472 = vmatprep.subr.mxu0 0.0
    %473 = vmatpush1.msra.mxu0 0.0
    %474 = vmatprep.subr.mxu0 0.0
    %475 = vmatpush1.msra.mxu0 0.0
    %476 = vmatprep.subr.mxu0 0.0
    %477 = vmatpush1.msra.mxu0 0.0
    %478 = vmatprep.mubr.f32.mxu0 0.0
    %479 = vmatmul.mubr.f32.gmra.mrb[0].mxu0 %v412
    %v480 = vpop.f32.mrb[0].mxu0
    %v481 = vadd.f32 0.0, %v480
    %v482 = vpop.f32.mrb[0].mxu0
    %483 = vdwg.mxu0
    %485 = vset.pattern.permute.xlu0 0
    %486 = vperm.xlu0 %485, %v393
    %v487 = vpop.permute.xlu0 %486
    %490 = vset.pattern.permute.xlu0 0
    %491 = vperm.xlu0 %490, %v398
    %v492 = vpop.permute.xlu0 %491
    %495 = vset.pattern.permute.xlu0 0
    %496 = vperm.xlu0 %495, %v403
    %v497 = vpop.permute.xlu0 %496
    %500 = vset.pattern.permute.xlu0 0
    %501 = vperm.xlu0 %500, %v408
    %v502 = vpop.permute.xlu0 %501
    %v504 = vlaneseq
    %v505 = vshrl.u32 %v504, 7
    %v506 = vsub.s32 0, %v505
    %v507 = vrot.slane %v481, %v506
    %v508 = vadd.f32 %v487, %v507
    %v509 = vadd.f32 %v492, %v507
    %v510 = vadd.f32 %v497, %v507
    %v511 = vadd.f32 %v502, %v507
    %v512 = vmul.f32 %v508, 2.0
    %v513 = vmul.f32 %v509, 2.0
    %v514 = vmul.f32 %v510, 2.0
    %v515 = vmul.f32 %v511, 2.0
    %v516 = vlaneseq
    %v517 = vshrl.u32 %v516, 7
    %v518 = vsub.s32 0, %v517
    %v519 = vrot.slane %v27, %v518
    %v521 = vmul.f32 %v298, %v519
    %v522 = vmul.f32 %v301, %v519
    %v523 = vmul.f32 %v304, %v519
    %v524 = vmul.f32 %v307, %v519
    // While loop
    $region18: #{tpu_custom_call.1} parent=1 // loop_pre_header
      _
    $region19: #{tpu_custom_call.1} parent=1 // loop_header
      %s526 = sphi 0, %s985
      %v527 = vphi %v521, %v977
      %v528 = vphi %v522, %v978
      %v529 = vphi %v523, %v979
      %v530 = vphi %v524, %v980
      %v531 = vphi 0.0, %v740
      %v532 = vphi 0.0, %v741
      %v533 = vphi 0.0, %v742
      %v534 = vphi 0.0, %v743
      %s535 = sphi inf, %s1005
      %p536 = scmp.lt.s32.totalorder %s526, 20
      %p537 = scmp.ge.f32.partialorder %s535, 1e-18
      %p538 = pnand %p536, %p537
      %p539 = pneg %p538
    $region20: #{tpu_custom_call.1} parent=1 // loop_header_branch
      %541 = sbr.rel (%p538) target = $region24
    $region21: #{tpu_custom_call.1} parent=1 // loop_body
      %v543 = vsel %vm149, %v179, 0
      %v546 = vsel %vm149, %v180, 0
      %v549 = vsel %vm149, %v181, 0
      %v552 = vsel %vm149, %v182, 0
      %554 = vmatprep.subr.mxu0 0.0
      %555 = vmatpush1.msra.mxu0 %v527
      %556 = vmatprep.subr.mxu0 0.0
      %557 = vmatpush1.msra.mxu0 %v528
      %558 = vmatprep.subr.mxu0 0.0
      %559 = vmatpush1.msra.mxu0 %v529
      %560 = vmatprep.subr.mxu0 0.0
      %561 = vmatpush1.msra.mxu0 %v530
      %562 = vmatprep.subr.mxu0 0.0
      %563 = vmatpush1.msra.mxu0 0.0
      %564 = vmatprep.subr.mxu0 0.0
      %565 = vmatpush1.msra.mxu0 0.0
      %566 = vmatprep.subr.mxu0 0.0
      %567 = vmatpush1.msra.mxu0 0.0
      %568 = vmatprep.subr.mxu0 0.0
      %569 = vmatpush1.msra.mxu0 0.0
      %570 = vmatprep.subr.mxu0 0.0
      %571 = vmatpush1.msra.mxu0 0.0
      %572 = vmatprep.subr.mxu0 0.0
      %573 = vmatpush1.msra.mxu0 0.0
      %574 = vmatprep.subr.mxu0 0.0
      %575 = vmatpush1.msra.mxu0 0.0
      %576 = vmatprep.subr.mxu0 0.0
      %577 = vmatpush1.msra.mxu0 0.0
      %578 = vmatprep.subr.mxu0 0.0
      %579 = vmatpush1.msra.mxu0 0.0
      %580 = vmatprep.subr.mxu0 0.0
      %581 = vmatpush1.msra.mxu0 0.0
      %582 = vmatprep.subr.mxu0 0.0
      %583 = vmatpush1.msra.mxu0 0.0
      %584 = vmatprep.subr.mxu0 0.0
      %585 = vmatpush1.msra.mxu0 0.0
      %586 = vmatprep.subr.mxu0 0.0
      %587 = vmatpush1.msra.mxu0 0.0
      %588 = vmatprep.subr.mxu0 0.0
      %589 = vmatpush1.msra.mxu0 0.0
      %590 = vmatprep.subr.mxu0 0.0
      %591 = vmatpush1.msra.mxu0 0.0
      %592 = vmatprep.subr.mxu0 0.0
      %593 = vmatpush1.msra.mxu0 0.0
      %594 = vmatprep.subr.mxu0 0.0
      %595 = vmatpush1.msra.mxu0 0.0
      %596 = vmatprep.subr.mxu0 0.0
      %597 = vmatpush1.msra.mxu0 0.0
      %598 = vmatprep.subr.mxu0 0.0
      %599 = vmatpush1.msra.mxu0 0.0
      %600 = vmatprep.subr.mxu0 0.0
      %601 = vmatpush1.msra.mxu0 0.0
      %602 = vmatprep.subr.mxu0 0.0
      %603 = vmatpush1.msra.mxu0 0.0
      %604 = vmatprep.subr.mxu0 0.0
      %605 = vmatpush1.msra.mxu0 0.0
      %606 = vmatprep.subr.mxu0 0.0
      %607 = vmatpush1.msra.mxu0 0.0
      %608 = vmatprep.subr.mxu0 0.0
      %609 = vmatpush1.msra.mxu0 0.0
      %610 = vmatprep.subr.mxu0 0.0
      %611 = vmatpush1.msra.mxu0 0.0
      %612 = vmatprep.subr.mxu0 0.0
      %613 = vmatpush1.msra.mxu0 0.0
      %614 = vmatprep.subr.mxu0 0.0
      %615 = vmatpush1.msra.mxu0 0.0
      %616 = vmatprep.subr.mxu0 0.0
      %617 = vmatpush1.msra.mxu0 0.0
      %618 = vmatprep.mubr.f32.mxu0 0.0
      %619 = vmatmul.mubr.f32.gmra.mrb[0].mxu0 %v543
      %v620 = vpop.f32.mrb[0].mxu0
      %v621 = vadd.f32 0.0, %v620
      %v622 = vpop.f32.mrb[0].mxu0
      %623 = vmatprep.mubr.f32.mxu0 0.0
      %624 = vmatmul.mubr.f32.gmra.mrb[0].mxu0 %v546
      %v625 = vpop.f32.mrb[0].mxu0
      %v626 = vadd.f32 0.0, %v625
      %v627 = vpop.f32.mrb[0].mxu0
      %628 = vmatprep.mubr.f32.mxu0 0.0
      %629 = vmatmul.mubr.f32.gmra.mrb[0].mxu0 %v549
      %v630 = vpop.f32.mrb[0].mxu0
      %v631 = vadd.f32 0.0, %v630
      %v632 = vpop.f32.mrb[0].mxu0
      %633 = vmatprep.mubr.f32.mxu0 0.0
      %634 = vmatmul.mubr.f32.gmra.mrb[0].mxu0 %v552
      %v635 = vpop.f32.mrb[0].mxu0
      %v636 = vadd.f32 0.0, %v635
      %v637 = vpop.f32.mrb[0].mxu0
      %638 = vdwg.mxu0
      %v640 = vsel %vm266, %v621, 0
      %v643 = vsel %vm266, %v626, 0
      %v646 = vsel %vm266, %v631, 0
      %v649 = vsel %vm266, %v636, 0
      %651 = vmatprep.subr.mxu0 0.0
      %652 = vmatpush1.msra.mxu0 %v284
      %653 = vmatprep.subr.mxu0 0.0
      %654 = vmatpush1.msra.mxu0 %v285
      %655 = vmatprep.subr.mxu0 0.0
      %656 = vmatpush1.msra.mxu0 0.0
      %657 = vmatprep.subr.mxu0 0.0
      %658 = vmatpush1.msra.mxu0 0.0
      %659 = vmatprep.subr.mxu0 0.0
      %660 = vmatpush1.msra.mxu0 0.0
      %661 = vmatprep.subr.mxu0 0.0
      %662 = vmatpush1.msra.mxu0 0.0
      %663 = vmatprep.subr.mxu0 0.0
      %664 = vmatpush1.msra.mxu0 0.0
      %665 = vmatprep.subr.mxu0 0.0
      %666 = vmatpush1.msra.mxu0 0.0
      %667 = vmatprep.subr.mxu0 0.0
      %668 = vmatpush1.msra.mxu0 0.0
      %669 = vmatprep.subr.mxu0 0.0
      %670 = vmatpush1.msra.mxu0 0.0
      %671 = vmatprep.subr.mxu0 0.0
      %672 = vmatpush1.msra.mxu0 0.0
      %673 = vmatprep.subr.mxu0 0.0
      %674 = vmatpush1.msra.mxu0 0.0
      %675 = vmatprep.subr.mxu0 0.0
      %676 = vmatpush1.msra.mxu0 0.0
      %677 = vmatprep.subr.mxu0 0.0
      %678 = vmatpush1.msra.mxu0 0.0
      %679 = vmatprep.subr.mxu0 0.0
      %680 = vmatpush1.msra.mxu0 0.0
      %681 = vmatprep.subr.mxu0 0.0
      %682 = vmatpush1.msra.mxu0 0.0
      %683 = vmatprep.subr.mxu0 0.0
      %684 = vmatpush1.msra.mxu0 0.0
      %685 = vmatprep.subr.mxu0 0.0
      %686 = vmatpush1.msra.mxu0 0.0
      %687 = vmatprep.subr.mxu0 0.0
      %688 = vmatpush1.msra.mxu0 0.0
      %689 = vmatprep.subr.mxu0 0.0
      %690 = vmatpush1.msra.mxu0 0.0
      %691 = vmatprep.subr.mxu0 0.0
      %692 = vmatpush1.msra.mxu0 0.0
      %693 = vmatprep.subr.mxu0 0.0
      %694 = vmatpush1.msra.mxu0 0.0
      %695 = vmatprep.subr.mxu0 0.0
      %696 = vmatpush1.msra.mxu0 0.0
      %697 = vmatprep.subr.mxu0 0.0
      %698 = vmatpush1.msra.mxu0 0.0
      %699 = vmatprep.subr.mxu0 0.0
      %700 = vmatpush1.msra.mxu0 0.0
      %701 = vmatprep.subr.mxu0 0.0
      %702 = vmatpush1.msra.mxu0 0.0
      %703 = vmatprep.subr.mxu0 0.0
      %704 = vmatpush1.msra.mxu0 0.0
      %705 = vmatprep.subr.mxu0 0.0
      %706 = vmatpush1.msra.mxu0 0.0
      %707 = vmatprep.subr.mxu0 0.0
      %708 = vmatpush1.msra.mxu0 0.0
      %709 = vmatprep.subr.mxu0 0.0
      %710 = vmatpush1.msra.mxu0 0.0
      %711 = vmatprep.subr.mxu0 0.0
      %712 = vmatpush1.msra.mxu0 0.0
      %713 = vmatprep.subr.mxu0 0.0
      %714 = vmatpush1.msra.mxu0 0.0
      %715 = vmatprep.mubr.f32.mxu0 0.0
      %716 = vmatmul.mubr.f32.gmra.mrb[0].mxu0 %v640
      %v717 = vpop.f32.mrb[0].mxu0
      %v718 = vadd.f32 0.0, %v717
      %v719 = vpop.f32.mrb[0].mxu0
      %720 = vmatprep.mubr.f32.mxu0 0.0
      %721 = vmatmul.mubr.f32.gmra.mrb[0].mxu0 %v643
      %v722 = vpop.f32.mrb[0].mxu0
      %v723 = vadd.f32 0.0, %v722
      %v724 = vpop.f32.mrb[0].mxu0
      %725 = vmatprep.mubr.f32.mxu0 0.0
      %726 = vmatmul.mubr.f32.gmra.mrb[0].mxu0 %v646
      %v727 = vpop.f32.mrb[0].mxu0
      %v728 = vadd.f32 0.0, %v727
      %v729 = vpop.f32.mrb[0].mxu0
      %730 = vmatprep.mubr.f32.mxu0 0.0
      %731 = vmatmul.mubr.f32.gmra.mrb[0].mxu0 %v649
      %v732 = vpop.f32.mrb[0].mxu0
      %v733 = vadd.f32 0.0, %v732
      %v734 = vpop.f32.mrb[0].mxu0
      %735 = vdwg.mxu0
      %v736 = vmul.f32 %v718, 4.0
      %v737 = vmul.f32 %v723, 4.0
      %v738 = vmul.f32 %v728, 4.0
      %v739 = vmul.f32 %v733, 4.0
      %v740 = vsub.f32 %v512, %v736
      %v741 = vsub.f32 %v513, %v737
      %v742 = vsub.f32 %v514, %v738
      %v743 = vsub.f32 %v515, %v739
      %v744 = vmul.f32 %v740, -1.0
      %v745 = vmul.f32 %v741, -1.0
      %v746 = vmul.f32 %v742, -1.0
      %v747 = vmul.f32 %v743, -1.0
      %v748 = vmul.f32 %v744, 1.442695
      %v749 = vpow.pop %v748
      %v750 = vmul.f32 %v745, 1.442695
      %v751 = vpow.pop %v750
      %v752 = vmul.f32 %v746, 1.442695
      %v753 = vpow.pop %v752
      %v754 = vmul.f32 %v747, 1.442695
      %v755 = vpow.pop %v754
      // While loop
      $region25: #{tpu_custom_call.1} parent=21 // loop_pre_header
        _
      $region26: #{tpu_custom_call.1} parent=21 // loop_header
        %s757 = sphi 0, %s932
        %v758 = vphi 1.0, %v854
        %v759 = vphi 1.0, %v930
        %s760 = sphi inf, %s944
        %p761 = scmp.lt.s32.totalorder %s757, 50
        %p762 = scmp.ge.f32.partialorder %s760, 1e-24
        %p763 = pnand %p761, %p762
        %p764 = pneg %p763
      $region27: #{tpu_custom_call.1} parent=21 // loop_header_branch
        %766 = sbr.rel (%p763) target = $region31
      $region28: #{tpu_custom_call.1} parent=21 // loop_body
        %v768 = vsel %vm266, %v759, 0
        %v771 = vsel %vm266, %v749, 0
        %v774 = vsel %vm266, %v751, 0
        %v777 = vsel %vm266, %v753, 0
        %v780 = vsel %vm266, %v755, 0
        %782 = vmatprep.subr.mxu0 0.0
        %783 = vmatpush1.xpose.msra.mxu0 %v771
        %784 = vmatprep.subr.mxu0 0.0
        %785 = vmatpush1.xpose.msra.mxu0 %v774
        %786 = vmatprep.subr.mxu0 0.0
        %787 = vmatpush1.xpose.msra.mxu0 %v777
        %788 = vmatprep.subr.mxu0 0.0
        %789 = vmatpush1.xpose.msra.mxu0 %v780
        %790 = vmatprep.subr.mxu0 0.0
        %791 = vmatpush1.xpose.msra.mxu0 0.0
        %792 = vmatprep.subr.mxu0 0.0
        %793 = vmatpush1.xpose.msra.mxu0 0.0
        %794 = vmatprep.subr.mxu0 0.0
        %795 = vmatpush1.xpose.msra.mxu0 0.0
        %796 = vmatprep.subr.mxu0 0.0
        %797 = vmatpush1.xpose.msra.mxu0 0.0
        %798 = vmatprep.subr.mxu0 0.0
        %799 = vmatpush1.xpose.msra.mxu0 0.0
        %800 = vmatprep.subr.mxu0 0.0
        %801 = vmatpush1.xpose.msra.mxu0 0.0
        %802 = vmatprep.subr.mxu0 0.0
        %803 = vmatpush1.xpose.msra.mxu0 0.0
        %804 = vmatprep.subr.mxu0 0.0
        %805 = vmatpush1.xpose.msra.mxu0 0.0
        %806 = vmatprep.subr.mxu0 0.0
        %807 = vmatpush1.xpose.msra.mxu0 0.0
        %808 = vmatprep.subr.mxu0 0.0
        %809 = vmatpush1.xpose.msra.mxu0 0.0
        %810 = vmatprep.subr.mxu0 0.0
        %811 = vmatpush1.xpose.msra.mxu0 0.0
        %812 = vmatprep.subr.mxu0 0.0
        %813 = vmatpush1.xpose.msra.mxu0 0.0
        %814 = vmatprep.subr.mxu0 0.0
        %815 = vmatpush1.xpose.msra.mxu0 0.0
        %816 = vmatprep.subr.mxu0 0.0
        %817 = vmatpush1.xpose.msra.mxu0 0.0
        %818 = vmatprep.subr.mxu0 0.0
        %819 = vmatpush1.xpose.msra.mxu0 0.0
        %820 = vmatprep.subr.mxu0 0.0
        %821 = vmatpush1.xpose.msra.mxu0 0.0
        %822 = vmatprep.subr.mxu0 0.0
        %823 = vmatpush1.xpose.msra.mxu0 0.0
        %824 = vmatprep.subr.mxu0 0.0
        %825 = vmatpush1.xpose.msra.mxu0 0.0
        %826 = vmatprep.subr.mxu0 0.0
        %827 = vmatpush1.xpose.msra.mxu0 0.0
        %828 = vmatprep.subr.mxu0 0.0
        %829 = vmatpush1.xpose.msra.mxu0 0.0
        %830 = vmatprep.subr.mxu0 0.0
        %831 = vmatpush1.xpose.msra.mxu0 0.0
        %832 = vmatprep.subr.mxu0 0.0
        %833 = vmatpush1.xpose.msra.mxu0 0.0
        %834 = vmatprep.subr.mxu0 0.0
        %835 = vmatpush1.xpose.msra.mxu0 0.0
        %836 = vmatprep.subr.mxu0 0.0
        %837 = vmatpush1.xpose.msra.mxu0 0.0
        %838 = vmatprep.subr.mxu0 0.0
        %839 = vmatpush1.xpose.msra.mxu0 0.0
        %840 = vmatprep.subr.mxu0 0.0
        %841 = vmatpush1.xpose.msra.mxu0 0.0
        %842 = vmatprep.subr.mxu0 0.0
        %843 = vmatpush1.xpose.msra.mxu0 0.0
        %844 = vmatprep.subr.mxu0 0.0
        %845 = vmatpush1.xpose.msra.mxu0 0.0
        %846 = vmatprep.mubr.f32.mxu0 0.0
        %847 = vmatmul.mubr.f32.gmra.mrb[0].mxu0 %v768
        %v848 = vpop.f32.mrb[0].mxu0
        %v849 = vadd.f32 0.0, %v848
        %v850 = vpop.f32.mrb[0].mxu0
        %851 = vdwg.mxu0
        %v852 = vmax.f32 %v849, 1e-30
        %v853 = vrcp.pop %v852
        %v854 = vmul.f32 %v26, %v853
        %v856 = vsel %vm149, %v854, 0
        %858 = vmatprep.subr.mxu0 0.0
        %859 = vmatpush1.msra.mxu0 %v749
        %860 = vmatprep.subr.mxu0 0.0
        %861 = vmatpush1.msra.mxu0 %v751
        %862 = vmatprep.subr.mxu0 0.0
        %863 = vmatpush1.msra.mxu0 %v753
        %864 = vmatprep.subr.mxu0 0.0
        %865 = vmatpush1.msra.mxu0 %v755
        %866 = vmatprep.subr.mxu0 0.0
        %867 = vmatpush1.msra.mxu0 0.0
        %868 = vmatprep.subr.mxu0 0.0
        %869 = vmatpush1.msra.mxu0 0.0
        %870 = vmatprep.subr.mxu0 0.0
        %871 = vmatpush1.msra.mxu0 0.0
        %872 = vmatprep.subr.mxu0 0.0
        %873 = vmatpush1.msra.mxu0 0.0
        %874 = vmatprep.subr.mxu0 0.0
        %875 = vmatpush1.msra.mxu0 0.0
        %876 = vmatprep.subr.mxu0 0.0
        %877 = vmatpush1.msra.mxu0 0.0
        %878 = vmatprep.subr.mxu0 0.0
        %879 = vmatpush1.msra.mxu0 0.0
        %880 = vmatprep.subr.mxu0 0.0
        %881 = vmatpush1.msra.mxu0 0.0
        %882 = vmatprep.subr.mxu0 0.0
        %883 = vmatpush1.msra.mxu0 0.0
        %884 = vmatprep.subr.mxu0 0.0
        %885 = vmatpush1.msra.mxu0 0.0
        %886 = vmatprep.subr.mxu0 0.0
        %887 = vmatpush1.msra.mxu0 0.0
        %888 = vmatprep.subr.mxu0 0.0
        %889 = vmatpush1.msra.mxu0 0.0
        %890 = vmatprep.subr.mxu0 0.0
        %891 = vmatpush1.msra.mxu0 0.0
        %892 = vmatprep.subr.mxu0 0.0
        %893 = vmatpush1.msra.mxu0 0.0
        %894 = vmatprep.subr.mxu0 0.0
        %895 = vmatpush1.msra.mxu0 0.0
        %896 = vmatprep.subr.mxu0 0.0
        %897 = vmatpush1.msra.mxu0 0.0
        %898 = vmatprep.subr.mxu0 0.0
        %899 = vmatpush1.msra.mxu0 0.0
        %900 = vmatprep.subr.mxu0 0.0
        %901 = vmatpush1.msra.mxu0 0.0
        %902 = vmatprep.subr.mxu0 0.0
        %903 = vmatpush1.msra.mxu0 0.0
        %904 = vmatprep.subr.mxu0 0.0
        %905 = vmatpush1.msra.mxu0 0.0
        %906 = vmatprep.subr.mxu0 0.0
        %907 = vmatpush1.msra.mxu0 0.0
        %908 = vmatprep.subr.mxu0 0.0
        %909 = vmatpush1.msra.mxu0 0.0
        %910 = vmatprep.subr.mxu0 0.0
        %911 = vmatpush1.msra.mxu0 0.0
        %912 = vmatprep.subr.mxu0 0.0
        %913 = vmatpush1.msra.mxu0 0.0
        %914 = vmatprep.subr.mxu0 0.0
        %915 = vmatpush1.msra.mxu0 0.0
        %916 = vmatprep.subr.mxu0 0.0
        %917 = vmatpush1.msra.mxu0 0.0
        %918 = vmatprep.subr.mxu0 0.0
        %919 = vmatpush1.msra.mxu0 0.0
        %920 = vmatprep.subr.mxu0 0.0
        %921 = vmatpush1.msra.mxu0 0.0
        %922 = vmatprep.mubr.f32.mxu0 0.0
        %923 = vmatmul.mubr.f32.gmra.mrb[0].mxu0 %v856
        %v924 = vpop.f32.mrb[0].mxu0
        %v925 = vadd.f32 0.0, %v924
        %v926 = vpop.f32.mrb[0].mxu0
        %927 = vdwg.mxu0
        %v928 = vmax.f32 %v925, 1e-30
        %v929 = vrcp.pop %v928
        %v930 = vmul.f32 %v27, %v929
        %v931 = vsub.f32 %v854, %v758
        %s932 = sadd.s32 %s757, 1
        %v933 = vmul.f32 %v931, %v931
        %vm934 = vcmask 253952
        %v935 = vsel %vm934, %v933, 0.0
        %936 = vadd.xlane.f32.xlu0 %v935
        %v937 = vpop.xlane.xlu0 %936
        %v938 = vrot.slane %v937, 4
        %v939 = vadd.f32 %v937, %v938
        %v940 = vrot.slane %v939, 2
        %v941 = vadd.f32 %v939, %v940
        %v942 = vrot.slane %v941, 1
        %v943 = vadd.f32 %v941, %v942
        %s944 = vtos %v943
      $region29: #{tpu_custom_call.1} parent=21 // loop_footer
        _
      $region30: #{tpu_custom_call.1} parent=21 // loop_footer_branch
        %756 = sbr.rel target = $region26
      $region31: #{tpu_custom_call.1} parent=21 // loop_exit
        _
      %v946 = vlaneseq
      %v947 = vshrl.u32 %v946, 7
      %v948 = vsub.s32 0, %v947
      %v949 = vrot.slane %v758, %v948
      %v951 = vmul.f32 %v43, %v949
      %v952 = vmul.f32 %v44, %v949
      %v953 = vmul.f32 %v45, %v949
      %v954 = vmul.f32 %v46, %v949
      %v955 = vsel %vm149, %v951, 0.0
      %956 = vadd.xlane.f32.xlu0 %v955
      %v957 = vpop.xlane.xlu0 %956
      %v958 = vsel %vm149, %v952, 0.0
      %959 = vadd.xlane.f32.xlu0 %v958
      %v960 = vpop.xlane.xlu0 %959
      %v961 = vsel %vm149, %v953, 0.0
      %962 = vadd.xlane.f32.xlu0 %v961
      %v963 = vpop.xlane.xlu0 %962
      %v964 = vsel %vm149, %v954, 0.0
      %965 = vadd.xlane.f32.xlu0 %v964
      %v966 = vpop.xlane.xlu0 %965
      %v967 = vmul.f32 %v957, %v749
      %v968 = vmul.f32 %v960, %v751
      %v969 = vmul.f32 %v963, %v753
      %v970 = vmul.f32 %v966, %v755
      %v972 = vlaneseq
      %v973 = vshrl.u32 %v972, 7
      %v974 = vsub.s32 0, %v973
      %v975 = vrot.slane %v759, %v974
      %v977 = vmul.f32 %v967, %v975
      %v978 = vmul.f32 %v968, %v975
      %v979 = vmul.f32 %v969, %v975
      %v980 = vmul.f32 %v970, %v975
      %v981 = vsub.f32 %v977, %v527
      %v982 = vsub.f32 %v978, %v528
      %v983 = vsub.f32 %v979, %v529
      %v984 = vsub.f32 %v980, %v530
      %s985 = sadd.s32 %s526, 1
      %v986 = vmul.f32 %v981, %v981
      %v987 = vmul.f32 %v982, %v982
      %v988 = vmul.f32 %v983, %v983
      %v989 = vmul.f32 %v984, %v984
      %v990 = vsel %vm266, %v986, 0.0
      %v991 = vsel %vm266, %v987, 0.0
      %v992 = vadd.f32 %v990, %v991
      %v993 = vsel %vm266, %v988, 0.0
      %v994 = vadd.f32 %v992, %v993
      %v995 = vsel %vm266, %v989, 0.0
      %v996 = vadd.f32 %v994, %v995
      %997 = vadd.xlane.f32.xlu0 %v996
      %v998 = vpop.xlane.xlu0 %997
      %v999 = vrot.slane %v998, 4
      %v1000 = vadd.f32 %v998, %v999
      %v1001 = vrot.slane %v1000, 2
      %v1002 = vadd.f32 %v1000, %v1001
      %v1003 = vrot.slane %v1002, 1
      %v1004 = vadd.f32 %v1002, %v1003
      %s1005 = vtos %v1004
    $region22: #{tpu_custom_call.1} parent=1 // loop_footer
      _
    $region23: #{tpu_custom_call.1} parent=1 // loop_footer_branch
      %525 = sbr.rel target = $region19
    $region24: #{tpu_custom_call.1} parent=1 // loop_exit
      _
    %1006 = vst.msk [vmem:[%s5] sm:$0xff] %vm266, %v527
    %1007 = vst.msk [vmem:[%s5 + $0x8] sm:$0xff] %vm266, %v528
    %1008 = vst.msk [vmem:[%s5 + $0x10] sm:$0xff] %vm266, %v529
    %1009 = vst.msk [vmem:[%s5 + $0x18] sm:$0xff] %vm266, %v530
    %v1010 = vmul.f32 %v527, %v531
    %v1011 = vmul.f32 %v528, %v532
    %v1012 = vmul.f32 %v529, %v533
    %v1013 = vmul.f32 %v530, %v534
    %v1014 = vsel %vm266, %v1010, 0.0
    %1015 = vadd.xlane.f32.xlu0 %v1014
    %v1016 = vpop.xlane.xlu0 %1015
    %v1017 = vsel %vm266, %v1011, 0.0
    %1018 = vadd.xlane.f32.xlu0 %v1017
    %v1019 = vpop.xlane.xlu0 %1018
    %v1020 = vsel %vm266, %v1012, 0.0
    %1021 = vadd.xlane.f32.xlu0 %v1020
    %v1022 = vpop.xlane.xlu0 %1021
    %v1023 = vsel %vm266, %v1013, 0.0
    %1024 = vadd.xlane.f32.xlu0 %v1023
    %v1025 = vpop.xlane.xlu0 %1024
    %v1026 = vadd.f32 %v1016, %v1019
    %v1027 = vadd.f32 %v1026, %v1022
    %v1028 = vadd.f32 %v1027, %v1025
    %v1029 = vrot.slane %v1028, 4
    %v1030 = vadd.f32 %v1028, %v1029
    %v1031 = vrot.slane %v1030, 2
    %v1032 = vadd.f32 %v1030, %v1031
    %v1033 = vrot.slane %v1032, 1
    %v1034 = vadd.f32 %v1032, %v1033
    %vm1035 = vcmask 0
    %1036 = vst.msk [vmem:[#allocation2] sm:$0x1] %vm1035, %v1034
    // Predicated region
    $region32: #{tpu_custom_call.1} parent=1 // pred_check
      _
    $region33: #{tpu_custom_call.1} parent=1 // pred_check_branch
      %1038 = sbr.rel (0) target = $region35
    $region34: #{tpu_custom_call.1} parent=1 // pred_region
      %s1040 = ssub.s32 16, 16
      %1041 = vsyncadd [#allocation3], %s1040
      %s1043 = sshll.u32 [#allocation2], 4
      %s1044 = int_to_ptr.vmem [resolvable:$true] %s1043
      %1046 = dma.vmem_to_hbm [thread:$0]  %s1044, 16, %s4, [#allocation3]
    $region35: #{tpu_custom_call.1} parent=1 // pred_fallthru
      _
    // Predicated region
    $region36: #{tpu_custom_call.1} parent=1 // pred_check
      _
    $region37: #{tpu_custom_call.1} parent=1 // pred_check_branch
      %1048 = sbr.rel (0) target = $region39
    $region38: #{tpu_custom_call.1} parent=1 // pred_region
      _
    $region39: #{tpu_custom_call.1} parent=1 // pred_fallthru
      _
    // Predicated region
    $region40: #{tpu_custom_call.1} parent=1 // pred_check
      _
    $region41: #{tpu_custom_call.1} parent=1 // pred_check_branch
      %1050 = sbr.rel (0) target = $region43
    $region42: #{tpu_custom_call.1} parent=1 // pred_region
      %1051 = dma.done [#allocation3], 16
    $region43: #{tpu_custom_call.1} parent=1 // pred_fallthru
      _
    // Predicated region
    $region44: #{tpu_custom_call.1} parent=1 // pred_check
      _
    $region45: #{tpu_custom_call.1} parent=1 // pred_check_branch
      %1053 = sbr.rel (0) target = $region47
    $region46: #{tpu_custom_call.1} parent=1 // pred_region
      _
    $region47: #{tpu_custom_call.1} parent=1 // pred_fallthru
      _
    %1054 = vsyncpa [#allocation3], 1

</llo_original>
